<compile_context>
chip_gen: v6e
topology: v6e:2x2x1
jax: 0.10.0
libtpu: 0.0.40
codegen_flags: <defaults>
</compile_context>

<pallas_src>
import functools

import jax
import jax.numpy as jnp
from jax.experimental import pallas as pl
from jax.experimental.pallas import tpu as pltpu

LANES = 128


def _tpu_config():
    """Generation-aware knobs: (physical VMEM bytes, core splits, is_v7)."""
    kind = ""
    try:
        kind = jax.devices()[0].device_kind.lower()
    except Exception:
        pass
    is_v7 = ("v7" in kind) or ("tpu7" in kind)

    vmem_bytes = None
    try:  # Trace-time HW query; fall back to device_kind heuristics.
        vmem_bytes = int(pltpu.get_tpu_info().vmem_capacity_bytes)
    except Exception:
        vmem_bytes = None
    if not vmem_bytes:
        vmem_bytes = (64 if is_v7 else 128) * 1024 * 1024

    # Only megacore parts (two TensorCores sharing the grid) benefit from the
    # leading "parallel" split; on 1-TC chips it is just a serial outer loop.
    two_tc = is_v7 or ("v4" in kind) or ("v5p" in kind)
    num_splits = 2 if two_tc else 1
    return vmem_bytes, num_splits, is_v7


def _dice_kernel(p_ref, t_ref, out_ref, acc_inter, acc_denom, *,
                 tile_rows, valid_rows, tiles_per_split, needs_mask):
    c = pl.program_id(0)   # core-split ("parallel") axis
    i = pl.program_id(1)   # reduction ("arbitrary") axis

    @pl.when(i == 0)
    def _():
        acc_inter[...] = jnp.zeros_like(acc_inter)
        acc_denom[...] = jnp.zeros_like(acc_denom)

    p = p_ref[...].astype(jnp.float32)
    t = t_ref[...].astype(jnp.float32)

    inter = p * t
    denom = p + t

    def _accumulate(inter_v, denom_v):
        # (tile_rows,128) -> (tile_rows//8, 8, 128); summing axis 0 is pure
        # elementwise vreg adds (VPU) into the vreg-shaped accumulators.
        acc_inter[...] += jnp.sum(inter_v.reshape(-1, 8, LANES), axis=0)
        acc_denom[...] += jnp.sum(denom_v.reshape(-1, 8, LANES), axis=0)

    if needs_mask:
        blk = c * tiles_per_split + i
        # Only the final (and clamped dead) blocks contain rows >= valid_rows.
        block_is_ragged = (blk + 1) * tile_rows > valid_rows

        @pl.when(jnp.logical_not(block_is_ragged))
        def _():
            _accumulate(inter, denom)       # hot path: pure stream, no mask ops

        @pl.when(block_is_ragged)
        def _():
            row_ids = blk * tile_rows + jax.lax.broadcasted_iota(
                jnp.int32, (tile_rows, LANES), 0)
            keep = row_ids < valid_rows
            # Keep the select form: rows past the array end are garbage
            # (possibly NaN/Inf) and must not propagate.
            _accumulate(jnp.where(keep, inter, 0.0),
                        jnp.where(keep, denom, 0.0))
    else:
        _accumulate(inter, denom)

    @pl.when(i == pl.num_programs(1) - 1)
    def _():
        out_ref[0, 0] = jnp.sum(acc_inter[...])
        out_ref[0, 1] = jnp.sum(acc_denom[...])


def _partial_sums_pallas(p2d, t2d, rows, tile_rows, num_splits, vmem_limit_bytes):
    """Returns (sum(p*t), sum(p)+sum(t)) over a (rows, 128) view."""
    total_tiles = pl.cdiv(rows, tile_rows)
    num_splits = min(num_splits, total_tiles)
    tiles_per_split = pl.cdiv(total_tiles, num_splits)
    covered_rows = num_splits * tiles_per_split * tile_rows
    needs_mask = covered_rows != rows

    def in_map(c, i):
        blk = c * tiles_per_split + i
        # Clamp dead trailing tiles onto the last real block; their
        # contribution is zeroed by the (gated) in-kernel mask.
        return (jnp.minimum(blk, total_tiles - 1), 0)

    kernel = functools.partial(
        _dice_kernel,
        tile_rows=tile_rows,
        valid_rows=rows,
        tiles_per_split=tiles_per_split,
        needs_mask=needs_mask,
    )

    bytes_in = rows * LANES * (p2d.dtype.itemsize + t2d.dtype.itemsize)
    cost = pl.CostEstimate(
        flops=3 * rows * LANES,
        transcendentals=0,
        bytes_accessed=bytes_in + 8 * num_splits,
    )

    # TODO(synk): verify "parallel" actually shards the leading axis across
    # v7x TensorCores; if not, switch it to pltpu.CORE_PARALLEL.
    out = pl.pallas_call(
        kernel,
        out_shape=jax.ShapeDtypeStruct((num_splits, 2), jnp.float32),
        grid_spec=pltpu.PrefetchScalarGridSpec(
            num_scalar_prefetch=0,
            grid=(num_splits, tiles_per_split),
            in_specs=[
                pl.BlockSpec((tile_rows, LANES), in_map),
                pl.BlockSpec((tile_rows, LANES), in_map),
            ],
            out_specs=pl.BlockSpec((1, 2), lambda c, i: (c, 0),
                                   memory_space=pltpu.SMEM),
            scratch_shapes=[
                pltpu.VMEM((8, LANES), jnp.float32),
                pltpu.VMEM((8, LANES), jnp.float32),
            ],
        ),
        compiler_params=pltpu.CompilerParams(
            dimension_semantics=("parallel", "arbitrary"),
            vmem_limit_bytes=int(vmem_limit_bytes),
        ),
        cost_estimate=cost,
    )(p2d, t2d)

    return jnp.sum(out[:, 0]), jnp.sum(out[:, 1])


def dice_loss(prediction, target, smooth=1.0):
    """Pallas TPU implementation of DiceLoss.forward (V-Net)."""
    iflat = prediction.reshape(-1)
    tflat = target.reshape(-1)
    n = iflat.shape[0]

    vmem_capacity, num_splits, is_v7 = _tpu_config()
    p_item = jnp.dtype(prediction.dtype).itemsize
    t_item = jnp.dtype(target.dtype).itemsize

    rows = n // LANES

    # dtype-aware sublane rounding: 8 rows for 32-bit, 16 for bf16, 32 for
    # 8-bit inputs (packed-tile layout requirement).
    sublane = max(8, 32 // max(1, min(p_item, t_item)))

    # Per-step HBM payload per input: 4 MiB (8 MiB on v7x), capped by VMEM.
    target_bytes = (8 if is_v7 else 4) * 1024 * 1024
    target_bytes = min(target_bytes, max(vmem_capacity // 8, 1 << 20))
    tile_rows = target_bytes // (LANES * max(p_item, t_item))
    tile_rows = (tile_rows // sublane) * sublane
    tile_rows = min(tile_rows, (rows // sublane) * sublane)

    n_main = rows * LANES if tile_rows > 0 else 0

    inter = jnp.float32(0.0)
    denom = jnp.float32(0.0)

    # Lane tail (< 128 elems) or "too small for a tile" case: plain jnp on a
    # tiny slice — avoids a full-tensor pad copy.
    if n_main < n:
        tp = iflat[n_main:].astype(jnp.float32)
        tt = tflat[n_main:].astype(jnp.float32)
        inter = inter + jnp.sum(tp * tt)
        denom = denom + jnp.sum(tp) + jnp.sum(tt)

    if n_main > 0:
        p2d = iflat[:n_main].reshape(rows, LANES)
        t2d = tflat[:n_main].reshape(rows, LANES)

        # Double-buffered input windows + headroom, never above ~5/8 of the
        # generation's physical VMEM (40 MiB on v7x's 64 MiB, 80 MiB on 128).
        needed = 2 * tile_rows * LANES * (p_item + t_item)
        vmem_limit = min(needed + (8 << 20), (vmem_capacity * 5) // 8)

        k_inter, k_denom = _partial_sums_pallas(
            p2d, t2d, rows, tile_rows, num_splits, vmem_limit)
        inter = inter + k_inter
        denom = denom + k_denom

    smooth = jnp.float32(smooth)
    return -(2.0 * inter + smooth) / (denom + smooth)


def dice_loss_ref(prediction, target, smooth=1.0):
    iflat = prediction.reshape(-1).astype(jnp.float32)
    tflat = target.reshape(-1).astype(jnp.float32)
    intersection = jnp.sum(iflat * tflat)
    return -(2.0 * intersection + smooth) / (jnp.sum(iflat) + jnp.sum(tflat) + smooth)


if __name__ == "__main__":
    key = jax.random.PRNGKey(0)
    k1, k2 = jax.random.split(key)

    # NCHW inputs, as a segmentation head would emit (exercise the no-mask path).
    prediction = jax.nn.sigmoid(jax.random.normal(k1, (2, 4, 16, 16), jnp.float32))
    target = (jax.random.uniform(k2, (2, 4, 16, 16)) > 0.5).astype(jnp.float32)

    loss = jax.block_until_ready(dice_loss(prediction, target, smooth=1.0))
    ref = jax.block_until_ready(dice_loss_ref(prediction, target, smooth=1.0))
    assert jnp.allclose(loss, ref, rtol=1e-5, atol=1e-6), (loss, ref)

    # Ragged shape: exercises the gated mask path, the multi-tile grid,
    # dead-tile clamping (on 2-split configs) and the wrapper-side lane tail.
    k3, k4 = jax.random.split(k2)
    prediction2 = jax.nn.sigmoid(jax.random.normal(k3, (2, 3, 33, 33), jnp.float32))
    target2 = (jax.random.uniform(k4, (2, 3, 33, 33)) > 0.5).astype(jnp.float32)

    loss2 = jax.block_until_ready(dice_loss(prediction2, target2, smooth=1.0))
    ref2 = jax.block_until_ready(dice_loss_ref(prediction2, target2, smooth=1.0))
    assert jnp.allclose(loss2, ref2, rtol=1e-5, atol=1e-6), (loss2, ref2)

    # bf16 inputs: exercises the dtype-aware (16,128) packed-tile rounding and
    # the in-kernel f32 upcast.
    k5, k6 = jax.random.split(k4)
    prediction3 = jax.nn.sigmoid(
        jax.random.normal(k5, (2, 4, 16, 16), jnp.float32)).astype(jnp.bfloat16)
    target3 = (jax.random.uniform(k6, (2, 4, 16, 16)) > 0.5).astype(jnp.bfloat16)

    loss3 = jax.block_until_ready(dice_loss(prediction3, target3, smooth=1.0))
    ref3 = jax.block_until_ready(dice_loss_ref(prediction3, target3, smooth=1.0))
    assert jnp.allclose(loss3, ref3, rtol=1e-4, atol=1e-5), (loss3, ref3)

    print("KERNEL_OK")
</pallas_src>

<mosaic_0001>
module attributes {stable_mosaic.version = 11 : i64} {
  func.func @_dice_kernel(%arg0: i32, %arg1: i32, %arg2: memref<16x128xf32, #tpu.memory_space<vmem>>, %arg3: memref<16x128xf32, #tpu.memory_space<vmem>>, %arg4: memref<1x2xf32, #tpu.memory_space<smem>>, %arg5: memref<8x128xf32, #tpu.memory_space<vmem>>, %arg6: memref<8x128xf32, #tpu.memory_space<vmem>>) attributes {dimension_semantics = [#tpu.dimension_semantics<parallel>, #tpu.dimension_semantics<arbitrary>], iteration_bounds = array<i64: 1, 1>, scalar_prefetch = 0 : i64, scratch_operands = 2 : i64, tpu.core_type = #tpu.core_type<tc>, window_params = [{transform_indices = @transform_0, window_bounds = array<i64: 16, 128>}, {transform_indices = @transform_1, window_bounds = array<i64: 16, 128>}, {transform_indices = @transform_2, window_bounds = array<i64: 1, 2>}]} {
    %c0_i32 = arith.constant 0 : i32
    %0 = arith.cmpi eq, %arg1, %c0_i32 : i32
    %1 = arith.extui %0 : i1 to i32
    %c0_i32_0 = arith.constant 0 : i32
    %2 = arith.cmpi ne, %1, %c0_i32_0 : i32
    scf.if %2 {
      %cst_15 = arith.constant 0.000000e+00 : f32
      %20 = vector.broadcast %cst_15 : f32 to vector<8x128xf32>
      %c0_16 = arith.constant 0 : index
      %c0_17 = arith.constant 0 : index
      %21 = vector.load %arg5[%c0_16, %c0_17] : memref<8x128xf32, #tpu.memory_space<vmem>>, vector<8x128xf32>
      tpu.vector_store %arg5[%c0_16, %c0_17], %20 {strides = array<i32>} : memref<8x128xf32, #tpu.memory_space<vmem>>, vector<8x128xf32>,
      %cst_18 = arith.constant 0.000000e+00 : f32
      %22 = vector.broadcast %cst_18 : f32 to vector<8x128xf32>
      %c0_19 = arith.constant 0 : index
      %c0_20 = arith.constant 0 : index
      %23 = vector.load %arg6[%c0_19, %c0_20] : memref<8x128xf32, #tpu.memory_space<vmem>>, vector<8x128xf32>
      tpu.vector_store %arg6[%c0_19, %c0_20], %22 {strides = array<i32>} : memref<8x128xf32, #tpu.memory_space<vmem>>, vector<8x128xf32>,
    } else {
    }
    %c0 = arith.constant 0 : index
    %c0_1 = arith.constant 0 : index
    %3 = vector.load %arg2[%c0, %c0_1] : memref<16x128xf32, #tpu.memory_space<vmem>>, vector<16x128xf32>
    %c0_2 = arith.constant 0 : index
    %c0_3 = arith.constant 0 : index
    %4 = vector.load %arg3[%c0_2, %c0_3] : memref<16x128xf32, #tpu.memory_space<vmem>>, vector<16x128xf32>
    %5 = arith.mulf %3, %4 : vector<16x128xf32>
    %6 = arith.addf %3, %4 : vector<16x128xf32>
    %c0_4 = arith.constant 0 : index
    %c0_5 = arith.constant 0 : index
    %7 = vector.load %arg5[%c0_4, %c0_5] : memref<8x128xf32, #tpu.memory_space<vmem>>, vector<8x128xf32>
    %8 = vector.shape_cast %5 : vector<16x128xf32> to vector<2x8x128xf32>
    %cst = arith.constant dense<0.000000e+00> : vector<8x128xf32>
    %9 = vector.multi_reduction <add>, %8, %cst [0] : vector<2x8x128xf32> to vector<8x128xf32>
    %10 = arith.addf %7, %9 : vector<8x128xf32>
    %c0_6 = arith.constant 0 : index
    %c0_7 = arith.constant 0 : index
    %11 = vector.load %arg5[%c0_6, %c0_7] : memref<8x128xf32, #tpu.memory_space<vmem>>, vector<8x128xf32>
    tpu.vector_store %arg5[%c0_6, %c0_7], %10 {strides = array<i32>} : memref<8x128xf32, #tpu.memory_space<vmem>>, vector<8x128xf32>,
    %c0_8 = arith.constant 0 : index
    %c0_9 = arith.constant 0 : index
    %12 = vector.load %arg6[%c0_8, %c0_9] : memref<8x128xf32, #tpu.memory_space<vmem>>, vector<8x128xf32>
    %13 = vector.shape_cast %6 : vector<16x128xf32> to vector<2x8x128xf32>
    %cst_10 = arith.constant dense<0.000000e+00> : vector<8x128xf32>
    %14 = vector.multi_reduction <add>, %13, %cst_10 [0] : vector<2x8x128xf32> to vector<8x128xf32>
    %15 = arith.addf %12, %14 : vector<8x128xf32>
    %c0_11 = arith.constant 0 : index
    %c0_12 = arith.constant 0 : index
    %16 = vector.load %arg6[%c0_11, %c0_12] : memref<8x128xf32, #tpu.memory_space<vmem>>, vector<8x128xf32>
    tpu.vector_store %arg6[%c0_11, %c0_12], %15 {strides = array<i32>} : memref<8x128xf32, #tpu.memory_space<vmem>>, vector<8x128xf32>,
    %c0_i32_13 = arith.constant 0 : i32
    %17 = arith.cmpi eq, %arg1, %c0_i32_13 : i32
    %18 = arith.extui %17 : i1 to i32
    %c0_i32_14 = arith.constant 0 : i32
    %19 = arith.cmpi ne, %18, %c0_i32_14 : i32
    scf.if %19 {
      %c0_15 = arith.constant 0 : index
      %c0_16 = arith.constant 0 : index
      %20 = vector.load %arg5[%c0_15, %c0_16] : memref<8x128xf32, #tpu.memory_space<vmem>>, vector<8x128xf32>
      %21 = vector.shape_cast %20 : vector<8x128xf32> to vector<1x8x128xf32>
      %cst_17 = arith.constant dense<0.000000e+00> : vector<1xf32>
      %22 = vector.multi_reduction <add>, %21, %cst_17 [1, 2] : vector<1x8x128xf32> to vector<1xf32>
      %23 = vector.shape_cast %22 : vector<1xf32> to vector<1x1x1xf32>
      %24 = vector.extract %23[0, 0, 0] : f32 from vector<1x1x1xf32>
      %c0_18 = arith.constant 0 : index
      %c0_19 = arith.constant 0 : index
      %25 = memref.load %arg4[%c0_18, %c0_19] : memref<1x2xf32, #tpu.memory_space<smem>>
      memref.store %24, %arg4[%c0_18, %c0_19] : memref<1x2xf32, #tpu.memory_space<smem>>
      %c0_20 = arith.constant 0 : index
      %c0_21 = arith.constant 0 : index
      %26 = vector.load %arg6[%c0_20, %c0_21] : memref<8x128xf32, #tpu.memory_space<vmem>>, vector<8x128xf32>
      %27 = vector.shape_cast %26 : vector<8x128xf32> to vector<1x8x128xf32>
      %cst_22 = arith.constant dense<0.000000e+00> : vector<1xf32>
      %28 = vector.multi_reduction <add>, %27, %cst_22 [1, 2] : vector<1x8x128xf32> to vector<1xf32>
      %29 = vector.shape_cast %28 : vector<1xf32> to vector<1x1x1xf32>
      %30 = vector.extract %29[0, 0, 0] : f32 from vector<1x1x1xf32>
      %c0_23 = arith.constant 0 : index
      %c1 = arith.constant 1 : index
      %31 = memref.load %arg4[%c0_23, %c1] : memref<1x2xf32, #tpu.memory_space<smem>>
      memref.store %30, %arg4[%c0_23, %c1] : memref<1x2xf32, #tpu.memory_space<smem>>
    } else {
    }
    return
  }
  func.func @transform_0(%arg0: i32, %arg1: i32) -> (i32, i32) {
    %c1_i32 = arith.constant 1 : i32
    %0 = arith.muli %arg0, %c1_i32 : i32
    %1 = arith.addi %0, %arg1 : i32
    %c0_i32 = arith.constant 0 : i32
    %2 = arith.minsi %1, %c0_i32 : i32
    %c0_i32_0 = arith.constant 0 : i32
    %c0_i32_1 = arith.constant 0 : i32
    return %2, %c0_i32_0 : i32, i32
  }
  func.func @transform_1(%arg0: i32, %arg1: i32) -> (i32, i32) {
    %c1_i32 = arith.constant 1 : i32
    %0 = arith.muli %arg0, %c1_i32 : i32
    %1 = arith.addi %0, %arg1 : i32
    %c0_i32 = arith.constant 0 : i32
    %2 = arith.minsi %1, %c0_i32 : i32
    %c0_i32_0 = arith.constant 0 : i32
    %c0_i32_1 = arith.constant 0 : i32
    return %2, %c0_i32_0 : i32, i32
  }
  func.func @transform_2(%arg0: i32, %arg1: i32) -> (i32, i32) {
    %c0_i32 = arith.constant 0 : i32
    %c0_i32_0 = arith.constant 0 : i32
    return %arg0, %c0_i32 : i32, i32
  }
}

</mosaic_0001>

<llo_original>
// kernel: tpu_custom_call.1
$region0: #{tpu_custom_call.1}
  #allocation0 [shape = 'u32[]', space=smem, size = 0x4, offset = 0x4, fixed_abs, tag = 'smem constant byte address 0x4 - core index']
  #allocation1 [shape = 'u32[144,128]{1,0:T(1,128)}', space=vmem, size = 0x12000, scoped, tag = 'internal scratch']
  #allocation2 [shape = 'f32[8,128]{1,0:T(8,128)}', space=vmem, size = 0x1000, scoped, tag = 'scratch operand']
  #allocation3 [shape = 'f32[8,128]{1,0:T(8,128)}', space=vmem, size = 0x1000, scoped, tag = 'scratch operand']
  %s0 = inlined_call_operand.hbm [shape: f32[16,128], index: 0, kind: input, shape index: {}]
  %s1 = inlined_call_operand.hbm [shape: f32[16,128], index: 1, kind: input, shape index: {}]
  %s2 = inlined_call_operand.hbm [shape: f32[1,2], index: 2, kind: output, shape index: {}]
  %s3 = sld [smem:[#allocation0]]
  $region34: #{tpu_custom_call.1} parent=0
    _
  %s5 = ssub.s32 1, %s3
  %s6 = scalar_select 0, %s5, %s3
  $region1: #{tpu_custom_call.1} parent=0
    #allocation4 [shape = 'u8[8192]{0}', space=vmem, size = 0x2000, scoped, tag = 'input window, operand 0, single buffered']
    #allocation5 [shape = 's32[1]{0}', space=sflag, size = 0x4, scoped, tag = 'scoped memory for tpu_custom_call.1']
    #allocation6 [shape = 's32[1]{0}', space=sflag, size = 0x4, scoped, tag = 'scoped memory for tpu_custom_call.1']
    #allocation7 [shape = 'u8[8192]{0}', space=vmem, size = 0x2000, scoped, tag = 'input window, operand 1, single buffered']
    #allocation8 [shape = 's32[1]{0}', space=sflag, size = 0x4, scoped, tag = 'scoped memory for tpu_custom_call.1']
    #allocation9 [shape = 'u8[512]{0}', space=smem, size = 0x200, scoped, tag = 'output window, operand 0, single buffered']
    %7 = vsyncpa [#allocation5], 0
    %8 = vsyncpa [#allocation8], 0
    %9 = vsyncpa [#allocation6], 0
    // Predicated region
    $region2: #{tpu_custom_call.1} parent=1 // pred_check
      _
    $region3: #{tpu_custom_call.1} parent=1 // pred_check_branch
      %11 = sbr.rel (0) target = $region5
    $region4: #{tpu_custom_call.1} parent=1 // pred_region
      %s12 = sadd.s32 0, 0
      %p13 = scmp.lt.s32.totalorder %s12, 0
      %s14 = scalar_select %p13, %s12, 0
      %s15 = smul.u32 2, %s14
      %s17 = ssub.s32 256, 256
      %18 = vsyncadd [#allocation5], %s17
      %s19 = smul.addr %s15, 128
      %s20 = scalar_lea.hbm %s0, %s19
      %s21 = sshll.u32 [#allocation4], 4
      %s22 = int_to_ptr.vmem [resolvable:$true] %s21
      %27 = dma.hbm_to_vmem [thread:$0]  %s20, 256, %s22, [#allocation5], 128, 128, 8
    $region5: #{tpu_custom_call.1} parent=1 // pred_fallthru
      _
    // Predicated region
    $region6: #{tpu_custom_call.1} parent=1 // pred_check
      _
    $region7: #{tpu_custom_call.1} parent=1 // pred_check_branch
      %29 = sbr.rel (0) target = $region9
    $region8: #{tpu_custom_call.1} parent=1 // pred_region
      %s30 = sadd.s32 0, 0
      %p31 = scmp.lt.s32.totalorder %s30, 0
      %s32 = scalar_select %p31, %s30, 0
      %s33 = smul.u32 2, %s32
      %s35 = ssub.s32 256, 256
      %36 = vsyncadd [#allocation8], %s35
      %s37 = smul.addr %s33, 128
      %s38 = scalar_lea.hbm %s1, %s37
      %s39 = sshll.u32 [#allocation7], 4
      %s40 = int_to_ptr.vmem [resolvable:$true] %s39
      %45 = dma.hbm_to_vmem [thread:$0]  %s38, 256, %s40, [#allocation8], 128, 128, 8
    $region9: #{tpu_custom_call.1} parent=1 // pred_fallthru
      _
    // Predicated region
    $region10: #{tpu_custom_call.1} parent=1 // pred_check
      _
    $region11: #{tpu_custom_call.1} parent=1 // pred_check_branch
      %47 = sbr.rel (0) target = $region13
    $region12: #{tpu_custom_call.1} parent=1 // pred_region
      %48 = dma.done [#allocation5], 256
    $region13: #{tpu_custom_call.1} parent=1 // pred_fallthru
      _
    // Predicated region
    $region14: #{tpu_custom_call.1} parent=1 // pred_check
      _
    $region15: #{tpu_custom_call.1} parent=1 // pred_check_branch
      %50 = sbr.rel (0) target = $region17
    $region16: #{tpu_custom_call.1} parent=1 // pred_region
      %51 = dma.done [#allocation8], 256
    $region17: #{tpu_custom_call.1} parent=1 // pred_fallthru
      _
    %s52 = sadd.s32 0, 0
    %p53 = scmp.lt.s32.totalorder %s52, 0
    %s54 = scalar_select %p53, %s52, 0
    %s55 = smul.u32 2, %s54
    %s56 = sadd.s32 0, 0
    %p57 = scmp.lt.s32.totalorder %s56, 0
    %s58 = scalar_select %p57, %s56, 0
    %s59 = smul.u32 2, %s58
    %p60 = scmp.eq.s32.totalorder 0, 0
    // Predicated region
    $region18: #{tpu_custom_call.1} parent=1 // pred_check
      %p61 = pneg %p60
    $region19: #{tpu_custom_call.1} parent=1 // pred_check_branch
      %63 = sbr.rel (%p61) target = $region21
    $region20: #{tpu_custom_call.1} parent=1 // pred_region
      %64 = vst [vmem:[#allocation2] sm:$0xff] 0.0
      %65 = vst [vmem:[#allocation3] sm:$0xff] 0.0
    $region21: #{tpu_custom_call.1} parent=1 // pred_fallthru
      _
    %v66 = vld [vmem:[#allocation4] sm:$0xff]
    %v67 = vld [vmem:[#allocation4 + $0x8] sm:$0xff]
    %v68 = vld [vmem:[#allocation7] sm:$0xff]
    %v69 = vld [vmem:[#allocation7 + $0x8] sm:$0xff]
    %v70 = vmul.f32 %v66, %v68
    %v71 = vmul.f32 %v67, %v69
    %v72 = vadd.f32 %v66, %v68
    %v73 = vadd.f32 %v67, %v69
    %v74 = vld [vmem:[#allocation2] sm:$0xff]
    %v75 = vadd.f32 %v70, %v71
    %v76 = vadd.f32 %v74, %v75
    %77 = vst [vmem:[#allocation2] sm:$0xff] %v76
    %v78 = vld [vmem:[#allocation3] sm:$0xff]
    %v79 = vadd.f32 %v72, %v73
    %v80 = vadd.f32 %v78, %v79
    %81 = vst [vmem:[#allocation3] sm:$0xff] %v80
    // Predicated region
    $region22: #{tpu_custom_call.1} parent=1 // pred_check
      %p82 = pneg %p60
    $region23: #{tpu_custom_call.1} parent=1 // pred_check_branch
      %84 = sbr.rel (%p82) target = $region25
    $region24: #{tpu_custom_call.1} parent=1 // pred_region
      %v85 = vld [vmem:[#allocation2] sm:$0xff]
      %86 = vadd.xlane.f32.xlu0 %v85
      %v87 = vpop.xlane.xlu0 %86
      %v88 = vrot.slane %v87, 4
      %v89 = vadd.f32 %v87, %v88
      %v90 = vrot.slane %v89, 2
      %v91 = vadd.f32 %v89, %v90
      %v92 = vrot.slane %v91, 1
      %v93 = vadd.f32 %v91, %v92
      %s94 = vtos %v93
      %s95 = scalar_lea.smem [#allocation9], 0
      %96 = sst [smem:[%s95]] %s94
      %v97 = vld [vmem:[#allocation3] sm:$0xff]
      %98 = vadd.xlane.f32.xlu0 %v97
      %v99 = vpop.xlane.xlu0 %98
      %v100 = vrot.slane %v99, 4
      %v101 = vadd.f32 %v99, %v100
      %v102 = vrot.slane %v101, 2
      %v103 = vadd.f32 %v101, %v102
      %v104 = vrot.slane %v103, 1
      %v105 = vadd.f32 %v103, %v104
      %s106 = vtos %v105
      %s107 = scalar_lea.smem [#allocation9], 1
      %108 = sst [smem:[%s107]] %s106
    $region25: #{tpu_custom_call.1} parent=1 // pred_fallthru
      _
    // Predicated region
    $region26: #{tpu_custom_call.1} parent=1 // pred_check
      _
    $region27: #{tpu_custom_call.1} parent=1 // pred_check_branch
      %110 = sbr.rel (0) target = $region29
    $region28: #{tpu_custom_call.1} parent=1 // pred_region
      %s112 = ssub.s32 16, 16
      %113 = vsyncadd [#allocation6], %s112
      %116 = dma.smem_to_hbm [#allocation9], 16, %s2, [#allocation6]
    $region29: #{tpu_custom_call.1} parent=1 // pred_fallthru
      _
    // Predicated region
    $region30: #{tpu_custom_call.1} parent=1 // pred_check
      _
    $region31: #{tpu_custom_call.1} parent=1 // pred_check_branch
      %118 = sbr.rel (0) target = $region33
    $region32: #{tpu_custom_call.1} parent=1 // pred_region
      %119 = dma.done [#allocation6], 16
    $region33: #{tpu_custom_call.1} parent=1 // pred_fallthru
      _
    %120 = sfence
    %121 = vsyncpa [#allocation5], 1
    %122 = vsyncpa [#allocation8], 1
    %123 = vsyncpa [#allocation6], 1

</llo_original>
